<compile_context>
chip_gen: v5e
topology: v5e:2x2
jax: 0.10.0
libtpu: 0.0.40
codegen_flags: <defaults>
</compile_context>

<pallas_src>
import jax
import jax.numpy as jnp
from jax.experimental import pallas as pl
from jax.experimental.pallas import tpu as pltpu

# ---- model / problem sizes (small, consistent with the module) -------------
B, C, H, W = 8, 4, 16, 16
DIN = C * H * W          # flattened backbone input = 1024
DBB = 256                # backbone['dim'] (backbone_dim)
DFEAT = 128              # features_dim
K = 512                  # queue length (K % B == 0, as the module asserts)
EPS = 1e-12              # torch.nn.functional.normalize eps


def contrastive_kernel(ptr_ref, x_ref, wbb_ref, bbb_ref, w1_ref, b1_ref,
                       w2_ref, b2_ref, qin_hbm_ref, feat_ref, qout_hbm_ref,
                       feat_vmem, dma_sem):
    # qin_hbm_ref is only present to establish the input/output alias of the
    # HBM-resident queue; all rows except the B enqueued ones are preserved.
    del qin_hbm_ref

    # --- synthetic backbone: flatten -> Linear(DIN, DBB) -> ReLU -------------
    # (the backbone is a constructor argument in the PyTorch module; we supply
    #  a deterministic minimal one so the head / normalize / queue semantics
    #  can be reproduced exactly)
    h0 = jnp.dot(x_ref[...], wbb_ref[...], preferred_element_type=jnp.float32)
    h0 = jnp.maximum(h0 + bbb_ref[...], 0.0)

    # --- contrastive_head, head == 'mlp': Linear -> ReLU -> Linear -----------
    h1 = jnp.dot(h0.astype(jnp.bfloat16), w1_ref[...],
                 preferred_element_type=jnp.float32)
    h1 = jnp.maximum(h1 + b1_ref[...], 0.0)
    f = jnp.dot(h1.astype(jnp.bfloat16), w2_ref[...],
                preferred_element_type=jnp.float32) + b2_ref[...]

    # --- F.normalize(features, dim=1): x / max(||x||_2, eps), in f32 ---------
    sumsq = jnp.sum(f * f, axis=1, keepdims=True)
    fn = f * jax.lax.rsqrt(jnp.maximum(sumsq, EPS * EPS))
    feat_ref[...] = fn
    feat_vmem[...] = fn

    # --- _dequeue_and_enqueue: write ONLY the B rows [ptr, ptr+B) of the queue
    # TODO(synk): concat_all_gather is identity for world_size == 1; a real
    # multi-chip version would use pltpu.make_async_remote_copy + semaphores.
    ptr = pl.multiple_of(ptr_ref[0], B)          # ptr advances by B, so aligned
    cp = pltpu.make_async_copy(feat_vmem, qout_hbm_ref.at[pl.ds(ptr, B), :],
                               dma_sem)
    cp.start()
    cp.wait()


def contrastive_forward(x, params, queue_t, queue_ptr):
    """x: [B, C, H, W] float32. Returns (features, new_queue_T, new_queue_ptr)."""
    x_flat = x.reshape(B, DIN).astype(jnp.bfloat16)
    ptr = queue_ptr.astype(jnp.int32)            # (1,) scalar, prefetched to SMEM

    grid_spec = pltpu.PrefetchScalarGridSpec(
        num_scalar_prefetch=1,
        grid=(1,),
        in_specs=[
            pl.BlockSpec((B, DIN),     lambda i, ptr: (0, 0)),   # x_flat (bf16)
            pl.BlockSpec((DIN, DBB),   lambda i, ptr: (0, 0)),   # backbone W (bf16)
            pl.BlockSpec((1, DBB),     lambda i, ptr: (0, 0)),   # backbone b (f32)
            pl.BlockSpec((DBB, DBB),   lambda i, ptr: (0, 0)),   # head W1 (bf16)
            pl.BlockSpec((1, DBB),     lambda i, ptr: (0, 0)),   # head b1 (f32)
            pl.BlockSpec((DBB, DFEAT), lambda i, ptr: (0, 0)),   # head W2 (bf16)
            pl.BlockSpec((1, DFEAT),   lambda i, ptr: (0, 0)),   # head b2 (f32)
            pl.BlockSpec(memory_space=pl.ANY),                   # queue_T (HBM, aliased)
        ],
        out_specs=(
            pl.BlockSpec((B, DFEAT),   lambda i, ptr: (0, 0)),   # features
            pl.BlockSpec(memory_space=pl.ANY),                   # queue_T out (HBM)
        ),
        scratch_shapes=[
            pltpu.VMEM((B, DFEAT), jnp.float32),                 # DMA staging for keys
            pltpu.SemaphoreType.DMA,
        ],
    )

    feat, queue_t_new = pl.pallas_call(
        contrastive_kernel,
        grid_spec=grid_spec,
        out_shape=(
            jax.ShapeDtypeStruct((B, DFEAT), jnp.float32),
            jax.ShapeDtypeStruct((K, DFEAT), jnp.float32),
        ),
        # call args: (ptr, x, wbb, bbb, w1, b1, w2, b2, queue_t) -> queue_t is arg 8;
        # alias it to output 1 so only the B enqueued rows ever move.
        input_output_aliases={8: 1},
        compiler_params=pltpu.CompilerParams(
            dimension_semantics=("arbitrary",)),
    )(ptr, x_flat, params["wbb"], params["bbb"], params["w1"], params["b1"],
      params["w2"], params["b2"], queue_t)

    new_ptr = (queue_ptr + B) % K                 # queue_ptr[0] = (ptr + batch) % K
    return feat, queue_t_new, new_ptr


def init_params_and_state(key):
    ks = jax.random.split(key, 8)
    scale = 0.02
    params = {
        # matmul operands stored in bf16 (halves weight HBM traffic); biases f32
        "wbb": (scale * jax.random.normal(ks[0], (DIN, DBB), jnp.float32)).astype(jnp.bfloat16),
        "bbb": scale * jax.random.normal(ks[1], (1, DBB), jnp.float32),
        "w1":  (scale * jax.random.normal(ks[2], (DBB, DBB), jnp.float32)).astype(jnp.bfloat16),
        "b1":  scale * jax.random.normal(ks[3], (1, DBB), jnp.float32),
        "w2":  (scale * jax.random.normal(ks[4], (DBB, DFEAT), jnp.float32)).astype(jnp.bfloat16),
        "b2":  scale * jax.random.normal(ks[5], (1, DFEAT), jnp.float32),
    }
    # queue buffer: randn(features_dim, K) normalized along dim=0,
    # stored transposed as [K, DFEAT] -> normalize each row. Kept f32.
    q = jax.random.normal(ks[6], (K, DFEAT), jnp.float32)
    q = q / jnp.maximum(jnp.sqrt(jnp.sum(q * q, axis=1, keepdims=True)), EPS)
    queue_ptr = jnp.zeros((1,), dtype=jnp.int32)
    return params, q, queue_ptr


if __name__ == "__main__":
    key = jax.random.PRNGKey(0)
    kx, kp = jax.random.split(key)
    x = jax.random.normal(kx, (B, C, H, W), jnp.float32)
    params, queue_t, queue_ptr = init_params_and_state(kp)

    # host copy for verification (queue_t is donated to the jitted call below)
    q_before = jax.device_get(queue_t)

    fwd = jax.jit(contrastive_forward, donate_argnums=(2,))
    feat, new_queue_t, new_ptr = fwd(x, params, queue_t, queue_ptr)
    jax.block_until_ready((feat, new_queue_t, new_ptr))

    # sanity checks: unit-norm features, keys enqueued at rows [0, B),
    # rest of the queue untouched, pointer advanced.
    norms = jnp.sqrt(jnp.sum(feat.astype(jnp.float32) ** 2, axis=1))
    assert jnp.allclose(norms, 1.0, atol=1e-5), norms
    assert jnp.allclose(new_queue_t[:B, :], feat, atol=1e-6)
    assert jnp.allclose(new_queue_t[B:, :], q_before[B:, :])
    assert int(new_ptr[0]) == B % K

    print("KERNEL_OK")
</pallas_src>

<mosaic_0001>
module attributes {stable_mosaic.version = 11 : i64} {
  func.func @contrastive_kernel(%arg0: i32, %arg1: memref<1xi32, #tpu.memory_space<smem>>, %arg2: memref<8x1024xbf16, #tpu.memory_space<vmem>>, %arg3: memref<1024x256xbf16, #tpu.memory_space<vmem>>, %arg4: memref<1x256xf32, #tpu.memory_space<vmem>>, %arg5: memref<256x256xbf16, #tpu.memory_space<vmem>>, %arg6: memref<1x256xf32, #tpu.memory_space<vmem>>, %arg7: memref<256x128xbf16, #tpu.memory_space<vmem>>, %arg8: memref<1x128xf32, #tpu.memory_space<vmem>>, %arg9: memref<512x128xf32, #tpu.memory_space<any>>, %arg10: memref<8x128xf32, #tpu.memory_space<vmem>>, %arg11: memref<512x128xf32, #tpu.memory_space<any>>, %arg12: memref<8x128xf32, #tpu.memory_space<vmem>>, %arg13: memref<!tpu.dma_semaphore, #tpu.memory_space<semaphore_mem>>) attributes {dimension_semantics = [#tpu.dimension_semantics<arbitrary>], iteration_bounds = array<i64: 1>, scalar_prefetch = 1 : i64, scratch_operands = 2 : i64, tpu.core_type = #tpu.core_type<tc>, window_params = [{pipeline_mode = #tpu.pipeline_mode<synchronous>, transform_indices = @transform_0, window_bounds = array<i64: 8, 1024>}, {pipeline_mode = #tpu.pipeline_mode<synchronous>, transform_indices = @transform_1, window_bounds = array<i64: 1024, 256>}, {pipeline_mode = #tpu.pipeline_mode<synchronous>, transform_indices = @transform_2, window_bounds = array<i64: 1, 256>}, {pipeline_mode = #tpu.pipeline_mode<synchronous>, transform_indices = @transform_3, window_bounds = array<i64: 256, 256>}, {pipeline_mode = #tpu.pipeline_mode<synchronous>, transform_indices = @transform_4, window_bounds = array<i64: 1, 256>}, {pipeline_mode = #tpu.pipeline_mode<synchronous>, transform_indices = @transform_5, window_bounds = array<i64: 256, 128>}, {pipeline_mode = #tpu.pipeline_mode<synchronous>, transform_indices = @transform_6, window_bounds = array<i64: 1, 128>}, {}, {pipeline_mode = #tpu.pipeline_mode<synchronous>, transform_indices = @transform_8, window_bounds = array<i64: 8, 128>}, {}]} {
    %c0 = arith.constant 0 : index
    %c0_0 = arith.constant 0 : index
    %0 = vector.load %arg2[%c0, %c0_0] : memref<8x1024xbf16, #tpu.memory_space<vmem>>, vector<8x1024xbf16>
    %c0_1 = arith.constant 0 : index
    %c0_2 = arith.constant 0 : index
    %1 = vector.load %arg3[%c0_1, %c0_2] : memref<1024x256xbf16, #tpu.memory_space<vmem>>, vector<1024x256xbf16>
    %cst = arith.constant dense<0.000000e+00> : vector<8x256xf32>
    %2 = tpu.matmul %0, %1, %cst {dimension_numbers = #tpu.dot_dimension_numbers<[1], [0], [0], [1], [0, 0, 1, 1], [], []>} : vector<8x1024xbf16>, vector<1024x256xbf16>, vector<8x256xf32> -> vector<8x256xf32>
    %c0_3 = arith.constant 0 : index
    %c0_4 = arith.constant 0 : index
    %3 = vector.load %arg4[%c0_3, %c0_4] : memref<1x256xf32, #tpu.memory_space<vmem>>, vector<1x256xf32>
    %4 = vector.broadcast %3 : vector<1x256xf32> to vector<8x256xf32>
    %5 = arith.addf %2, %4 : vector<8x256xf32>
    %cst_5 = arith.constant 0.000000e+00 : f32
    %6 = vector.broadcast %cst_5 : f32 to vector<8x256xf32>
    %7 = arith.maximumf %5, %6 : vector<8x256xf32>
    %8 = arith.truncf %7 : vector<8x256xf32> to vector<8x256xbf16>
    %c0_6 = arith.constant 0 : index
    %c0_7 = arith.constant 0 : index
    %9 = vector.load %arg5[%c0_6, %c0_7] : memref<256x256xbf16, #tpu.memory_space<vmem>>, vector<256x256xbf16>
    %cst_8 = arith.constant dense<0.000000e+00> : vector<8x256xf32>
    %10 = tpu.matmul %8, %9, %cst_8 {dimension_numbers = #tpu.dot_dimension_numbers<[1], [0], [0], [1], [0, 0, 1, 1], [], []>} : vector<8x256xbf16>, vector<256x256xbf16>, vector<8x256xf32> -> vector<8x256xf32>
    %c0_9 = arith.constant 0 : index
    %c0_10 = arith.constant 0 : index
    %11 = vector.load %arg6[%c0_9, %c0_10] : memref<1x256xf32, #tpu.memory_space<vmem>>, vector<1x256xf32>
    %12 = vector.broadcast %11 : vector<1x256xf32> to vector<8x256xf32>
    %13 = arith.addf %10, %12 : vector<8x256xf32>
    %cst_11 = arith.constant 0.000000e+00 : f32
    %14 = vector.broadcast %cst_11 : f32 to vector<8x256xf32>
    %15 = arith.maximumf %13, %14 : vector<8x256xf32>
    %16 = arith.truncf %15 : vector<8x256xf32> to vector<8x256xbf16>
    %c0_12 = arith.constant 0 : index
    %c0_13 = arith.constant 0 : index
    %17 = vector.load %arg7[%c0_12, %c0_13] : memref<256x128xbf16, #tpu.memory_space<vmem>>, vector<256x128xbf16>
    %cst_14 = arith.constant dense<0.000000e+00> : vector<8x128xf32>
    %18 = tpu.matmul %16, %17, %cst_14 {dimension_numbers = #tpu.dot_dimension_numbers<[1], [0], [0], [1], [0, 0, 1, 1], [], []>} : vector<8x256xbf16>, vector<256x128xbf16>, vector<8x128xf32> -> vector<8x128xf32>
    %c0_15 = arith.constant 0 : index
    %c0_16 = arith.constant 0 : index
    %19 = vector.load %arg8[%c0_15, %c0_16] : memref<1x128xf32, #tpu.memory_space<vmem>>, vector<1x128xf32>
    %20 = vector.broadcast %19 : vector<1x128xf32> to vector<8x128xf32>
    %21 = arith.addf %18, %20 : vector<8x128xf32>
    %22 = arith.mulf %21, %21 : vector<8x128xf32>
    %cst_17 = arith.constant dense<0.000000e+00> : vector<8xf32>
    %23 = vector.multi_reduction <add>, %22, %cst_17 [1] : vector<8x128xf32> to vector<8xf32>
    %24 = vector.shape_cast %23 : vector<8xf32> to vector<8x1xf32>
    %cst_18 = arith.constant 1.000000e-24 : f32
    %25 = vector.broadcast %cst_18 : f32 to vector<8x1xf32>
    %26 = arith.maximumf %24, %25 : vector<8x1xf32>
    %27 = math.rsqrt %26 : vector<8x1xf32>
    %28 = vector.broadcast %27 : vector<8x1xf32> to vector<8x128xf32>
    %29 = arith.mulf %21, %28 : vector<8x128xf32>
    %c0_19 = arith.constant 0 : index
    %c0_20 = arith.constant 0 : index
    %30 = vector.load %arg10[%c0_19, %c0_20] : memref<8x128xf32, #tpu.memory_space<vmem>>, vector<8x128xf32>
    tpu.vector_store %arg10[%c0_19, %c0_20], %29 {strides = array<i32>} : memref<8x128xf32, #tpu.memory_space<vmem>>, vector<8x128xf32>,
    %c0_21 = arith.constant 0 : index
    %c0_22 = arith.constant 0 : index
    %31 = vector.load %arg12[%c0_21, %c0_22] : memref<8x128xf32, #tpu.memory_space<vmem>>, vector<8x128xf32>
    tpu.vector_store %arg12[%c0_21, %c0_22], %29 {strides = array<i32>} : memref<8x128xf32, #tpu.memory_space<vmem>>, vector<8x128xf32>,
    %c0_23 = arith.constant 0 : index
    %32 = memref.load %arg1[%c0_23] : memref<1xi32, #tpu.memory_space<smem>>
    %33 = tpu.assume_multiple %32, 8 : i32
    %c0_i32 = arith.constant 0 : i32
    %34 = tpu.memref_slice %arg11[%33, %c0_i32] : memref<512x128xf32, #tpu.memory_space<any>> -> memref<8x128xf32, #tpu.memory_space<any>>
    tpu.enqueue_dma source(%arg12 : memref<8x128xf32, #tpu.memory_space<vmem>>) target(%34 : memref<8x128xf32, #tpu.memory_space<any>>) target_semaphore(%arg13 : memref<!tpu.dma_semaphore, #tpu.memory_space<semaphore_mem>>)
    %c0_i32_24 = arith.constant 0 : i32
    %35 = tpu.memref_slice %arg11[%33, %c0_i32_24] : memref<512x128xf32, #tpu.memory_space<any>> -> memref<8x128xf32, #tpu.memory_space<any>>
    tpu.wait_dma2 semaphore(%arg13 : memref<!tpu.dma_semaphore, #tpu.memory_space<semaphore_mem>>) src(%arg12 : memref<8x128xf32, #tpu.memory_space<vmem>>) dst(%35 : memref<8x128xf32, #tpu.memory_space<any>>)
    return
  }
  func.func @transform_0(%arg0: i32, %arg1: memref<1xi32, #tpu.memory_space<smem>>) -> (i32, i32) {
    %c0_i32 = arith.constant 0 : i32
    %c0_i32_0 = arith.constant 0 : i32
    %c0_i32_1 = arith.constant 0 : i32
    return %c0_i32, %c0_i32_0 : i32, i32
  }
  func.func @transform_1(%arg0: i32, %arg1: memref<1xi32, #tpu.memory_space<smem>>) -> (i32, i32) {
    %c0_i32 = arith.constant 0 : i32
    %c0_i32_0 = arith.constant 0 : i32
    %c0_i32_1 = arith.constant 0 : i32
    return %c0_i32, %c0_i32_0 : i32, i32
  }
  func.func @transform_2(%arg0: i32, %arg1: memref<1xi32, #tpu.memory_space<smem>>) -> (i32, i32) {
    %c0_i32 = arith.constant 0 : i32
    %c0_i32_0 = arith.constant 0 : i32
    %c0_i32_1 = arith.constant 0 : i32
    return %c0_i32, %c0_i32_0 : i32, i32
  }
  func.func @transform_3(%arg0: i32, %arg1: memref<1xi32, #tpu.memory_space<smem>>) -> (i32, i32) {
    %c0_i32 = arith.constant 0 : i32
    %c0_i32_0 = arith.constant 0 : i32
    %c0_i32_1 = arith.constant 0 : i32
    return %c0_i32, %c0_i32_0 : i32, i32
  }
  func.func @transform_4(%arg0: i32, %arg1: memref<1xi32, #tpu.memory_space<smem>>) -> (i32, i32) {
    %c0_i32 = arith.constant 0 : i32
    %c0_i32_0 = arith.constant 0 : i32
    %c0_i32_1 = arith.constant 0 : i32
    return %c0_i32, %c0_i32_0 : i32, i32
  }
  func.func @transform_5(%arg0: i32, %arg1: memref<1xi32, #tpu.memory_space<smem>>) -> (i32, i32) {
    %c0_i32 = arith.constant 0 : i32
    %c0_i32_0 = arith.constant 0 : i32
    %c0_i32_1 = arith.constant 0 : i32
    return %c0_i32, %c0_i32_0 : i32, i32
  }
  func.func @transform_6(%arg0: i32, %arg1: memref<1xi32, #tpu.memory_space<smem>>) -> (i32, i32) {
    %c0_i32 = arith.constant 0 : i32
    %c0_i32_0 = arith.constant 0 : i32
    %c0_i32_1 = arith.constant 0 : i32
    return %c0_i32, %c0_i32_0 : i32, i32
  }
  func.func @transform_8(%arg0: i32, %arg1: memref<1xi32, #tpu.memory_space<smem>>) -> (i32, i32) {
    %c0_i32 = arith.constant 0 : i32
    %c0_i32_0 = arith.constant 0 : i32
    %c0_i32_1 = arith.constant 0 : i32
    return %c0_i32, %c0_i32_0 : i32, i32
  }
}

</mosaic_0001>

<llo_original>
// kernel: contrastive_forward.1
$region0: #{contrastive_forward.1}
  #allocation0 [shape = 'u32[]', space=smem, size = 0x4, offset = 0x4, fixed_abs, tag = 'smem constant byte address 0x4 - core index']
  #allocation1 [shape = 'u32[72,128]{1,0:T(1,128)}', space=vmem, size = 0x9000, scoped, tag = 'internal scratch']
  #allocation2 [shape = 'f32[8,128]{1,0:T(8,128)}', space=vmem, size = 0x1000, scoped, tag = 'scratch operand']
  #allocation3 [shape = 's32[1]{0}', space=sflag, size = 0x4, scoped, tag = 'scratch operand']
  #allocation4 [shape = 's32[1]{0}', space=sflag, size = 0x4, scoped, tag = 'scoped memory for contrastive_forward.1']
  #allocation5 [shape = 's32[1]{0:T(128)S(6)}', space=smem, size = 0x200, scoped, tag = 'prefetched SMEM operand 0']
  #allocation10 [shape = 's32[]', space=sflag, size = 0x4, offset = 0, fixed_abs, tag = 'sflag constant byte address 0x0 - dummy sync flag']
  %s0 = inlined_call_operand.<no memory space> [shape: s32[1], index: 0, kind: input, shape index: {}]
  %s1 = inlined_call_operand.vmem [shape: bf16[8,1024], index: 1, kind: input, shape index: {}]
  %s2 = inlined_call_operand.hbm [shape: bf16[1024,256], index: 2, kind: input, shape index: {}]
  %s3 = inlined_call_operand.vmem [shape: f32[1,256], index: 3, kind: input, shape index: {}]
  %s4 = inlined_call_operand.vmem [shape: bf16[256,256], index: 4, kind: input, shape index: {}]
  %s5 = inlined_call_operand.vmem [shape: f32[1,256], index: 5, kind: input, shape index: {}]
  %s6 = inlined_call_operand.vmem [shape: bf16[256,128], index: 6, kind: input, shape index: {}]
  %s7 = inlined_call_operand.vmem [shape: f32[1,128], index: 7, kind: input, shape index: {}]
  %s8 = inlined_call_operand.vmem [shape: f32[512,128], index: 8, kind: input, shape index: {}, may-alias: {8,10}]
  %s9 = inlined_call_operand.hbm [shape: f32[8,128], index: 9, kind: output, shape index: {0}]
  %s10 = inlined_call_operand.vmem [shape: f32[512,128], index: 10, kind: output, shape index: {1}, may-alias: {8,10}]
  %11 = xla_tuple %s9, %s10
  %s12 = sld [smem:[#allocation0]]
  $region76: #{contrastive_forward.1} parent=0
    _
  %s14 = ssub.s32 1, %s12
  %s15 = scalar_select 0, %s14, %s12
  %16 = sst [smem:[#allocation5]] %s0
  $region1: #{contrastive_forward.1} parent=0
    #allocation6 [shape = 'u8[524288]{0}', space=vmem, size = 0x80000, scoped, tag = 'input window, operand 2, single buffered']
    #allocation7 [shape = 's32[1]{0}', space=sflag, size = 0x4, scoped, tag = 'scoped memory for contrastive_forward.1']
    #allocation8 [shape = 's32[1]{0}', space=sflag, size = 0x4, scoped, tag = 'scoped memory for contrastive_forward.1']
    #allocation9 [shape = 'u8[4096]{0}', space=vmem, size = 0x1000, scoped, tag = 'output window, operand 0, single buffered']
    %17 = vsyncpa [#allocation7], 0
    %18 = vsyncpa [#allocation8], 0
    // Predicated region
    $region2: #{contrastive_forward.1} parent=1 // pred_check
      _
    $region3: #{contrastive_forward.1} parent=1 // pred_check_branch
      %20 = sbr.rel (0) target = $region5
    $region4: #{contrastive_forward.1} parent=1 // pred_region
      _
    $region5: #{contrastive_forward.1} parent=1 // pred_fallthru
      _
    // Predicated region
    $region6: #{contrastive_forward.1} parent=1 // pred_check
      _
    $region7: #{contrastive_forward.1} parent=1 // pred_check_branch
      %22 = sbr.rel (0) target = $region9
    $region8: #{contrastive_forward.1} parent=1 // pred_region
      %24 = vsyncadd [#allocation7], 0
      %s25 = sshll.u32 %s2, 4
      %s26 = int_to_ptr.hbm [resolvable:$true] %s25
      %s27 = sshll.u32 [#allocation6], 4
      %s28 = int_to_ptr.vmem [resolvable:$true] %s27
      %33 = dma.hbm_to_vmem [thread:$0]  %s26, 16384, %s28, [#allocation7], 128, 128, 8
    $region9: #{contrastive_forward.1} parent=1 // pred_fallthru
      _
    // Predicated region
    $region10: #{contrastive_forward.1} parent=1 // pred_check
      _
    $region11: #{contrastive_forward.1} parent=1 // pred_check_branch
      %35 = sbr.rel (0) target = $region13
    $region12: #{contrastive_forward.1} parent=1 // pred_region
      _
    $region13: #{contrastive_forward.1} parent=1 // pred_fallthru
      _
    // Predicated region
    $region14: #{contrastive_forward.1} parent=1 // pred_check
      _
    $region15: #{contrastive_forward.1} parent=1 // pred_check_branch
      %37 = sbr.rel (0) target = $region17
    $region16: #{contrastive_forward.1} parent=1 // pred_region
      _
    $region17: #{contrastive_forward.1} parent=1 // pred_fallthru
      _
    // Predicated region
    $region18: #{contrastive_forward.1} parent=1 // pred_check
      _
    $region19: #{contrastive_forward.1} parent=1 // pred_check_branch
      %39 = sbr.rel (0) target = $region21
    $region20: #{contrastive_forward.1} parent=1 // pred_region
      _
    $region21: #{contrastive_forward.1} parent=1 // pred_fallthru
      _
    // Predicated region
    $region22: #{contrastive_forward.1} parent=1 // pred_check
      _
    $region23: #{contrastive_forward.1} parent=1 // pred_check_branch
      %41 = sbr.rel (0) target = $region25
    $region24: #{contrastive_forward.1} parent=1 // pred_region
      _
    $region25: #{contrastive_forward.1} parent=1 // pred_fallthru
      _
    // Predicated region
    $region26: #{contrastive_forward.1} parent=1 // pred_check
      _
    $region27: #{contrastive_forward.1} parent=1 // pred_check_branch
      %43 = sbr.rel (0) target = $region29
    $region28: #{contrastive_forward.1} parent=1 // pred_region
      _
    $region29: #{contrastive_forward.1} parent=1 // pred_fallthru
      _
    // Predicated region
    $region30: #{contrastive_forward.1} parent=1 // pred_check
      _
    $region31: #{contrastive_forward.1} parent=1 // pred_check_branch
      %45 = sbr.rel (0) target = $region33
    $region32: #{contrastive_forward.1} parent=1 // pred_region
      %47 = dma.done [#allocation7], 16384
    $region33: #{contrastive_forward.1} parent=1 // pred_fallthru
      _
    %v48 = vld [vmem:[%s1] sm:$0xff]
    %v49 = vld [vmem:[%s1 + $0x8] sm:$0xff]
    %v50 = vld [vmem:[%s1 + $0x10] sm:$0xff]
    %v51 = vld [vmem:[%s1 + $0x18] sm:$0xff]
    %v52 = vld [vmem:[#allocation6] sm:$0xff]
    %v53 = vld [vmem:[#allocation6 + $0x8] sm:$0xff]
    %v54 = vld [vmem:[#allocation6 + $0x10] sm:$0xff]
    %v55 = vld [vmem:[#allocation6 + $0x18] sm:$0xff]
    %v56 = vld [vmem:[#allocation6 + $0x20] sm:$0xff]
    %v57 = vld [vmem:[#allocation6 + $0x28] sm:$0xff]
    %v58 = vld [vmem:[#allocation6 + $0x30] sm:$0xff]
    %v59 = vld [vmem:[#allocation6 + $0x38] sm:$0xff]
    %v60 = vld [vmem:[#allocation6 + $0x40] sm:$0xff]
    %v61 = vld [vmem:[#allocation6 + $0x48] sm:$0xff]
    %v62 = vld [vmem:[#allocation6 + $0x50] sm:$0xff]
    %v63 = vld [vmem:[#allocation6 + $0x58] sm:$0xff]
    %v64 = vld [vmem:[#allocation6 + $0x60] sm:$0xff]
    %v65 = vld [vmem:[#allocation6 + $0x68] sm:$0xff]
    %v66 = vld [vmem:[#allocation6 + $0x70] sm:$0xff]
    %v67 = vld [vmem:[#allocation6 + $0x78] sm:$0xff]
    %v68 = vld [vmem:[#allocation6 + $0x80] sm:$0xff]
    %v69 = vld [vmem:[#allocation6 + $0x88] sm:$0xff]
    %v70 = vld [vmem:[#allocation6 + $0x90] sm:$0xff]
    %v71 = vld [vmem:[#allocation6 + $0x98] sm:$0xff]
    %v72 = vld [vmem:[#allocation6 + $0xa0] sm:$0xff]
    %v73 = vld [vmem:[#allocation6 + $0xa8] sm:$0xff]
    %v74 = vld [vmem:[#allocation6 + $0xb0] sm:$0xff]
    %v75 = vld [vmem:[#allocation6 + $0xb8] sm:$0xff]
    %v76 = vld [vmem:[#allocation6 + $0xc0] sm:$0xff]
    %v77 = vld [vmem:[#allocation6 + $0xc8] sm:$0xff]
    %v78 = vld [vmem:[#allocation6 + $0xd0] sm:$0xff]
    %v79 = vld [vmem:[#allocation6 + $0xd8] sm:$0xff]
    %v80 = vld [vmem:[#allocation6 + $0xe0] sm:$0xff]
    %v81 = vld [vmem:[#allocation6 + $0xe8] sm:$0xff]
    %v82 = vld [vmem:[#allocation6 + $0xf0] sm:$0xff]
    %v83 = vld [vmem:[#allocation6 + $0xf8] sm:$0xff]
    %v84 = vld [vmem:[#allocation6 + $0x100] sm:$0xff]
    %v85 = vld [vmem:[#allocation6 + $0x108] sm:$0xff]
    %v86 = vld [vmem:[#allocation6 + $0x110] sm:$0xff]
    %v87 = vld [vmem:[#allocation6 + $0x118] sm:$0xff]
    %v88 = vld [vmem:[#allocation6 + $0x120] sm:$0xff]
    %v89 = vld [vmem:[#allocation6 + $0x128] sm:$0xff]
    %v90 = vld [vmem:[#allocation6 + $0x130] sm:$0xff]
    %v91 = vld [vmem:[#allocation6 + $0x138] sm:$0xff]
    %v92 = vld [vmem:[#allocation6 + $0x140] sm:$0xff]
    %v93 = vld [vmem:[#allocation6 + $0x148] sm:$0xff]
    %v94 = vld [vmem:[#allocation6 + $0x150] sm:$0xff]
    %v95 = vld [vmem:[#allocation6 + $0x158] sm:$0xff]
    %v96 = vld [vmem:[#allocation6 + $0x160] sm:$0xff]
    %v97 = vld [vmem:[#allocation6 + $0x168] sm:$0xff]
    %v98 = vld [vmem:[#allocation6 + $0x170] sm:$0xff]
    %v99 = vld [vmem:[#allocation6 + $0x178] sm:$0xff]
    %v100 = vld [vmem:[#allocation6 + $0x180] sm:$0xff]
    %v101 = vld [vmem:[#allocation6 + $0x188] sm:$0xff]
    %v102 = vld [vmem:[#allocation6 + $0x190] sm:$0xff]
    %v103 = vld [vmem:[#allocation6 + $0x198] sm:$0xff]
    %v104 = vld [vmem:[#allocation6 + $0x1a0] sm:$0xff]
    %v105 = vld [vmem:[#allocation6 + $0x1a8] sm:$0xff]
    %v106 = vld [vmem:[#allocation6 + $0x1b0] sm:$0xff]
    %v107 = vld [vmem:[#allocation6 + $0x1b8] sm:$0xff]
    %v108 = vld [vmem:[#allocation6 + $0x1c0] sm:$0xff]
    %v109 = vld [vmem:[#allocation6 + $0x1c8] sm:$0xff]
    %v110 = vld [vmem:[#allocation6 + $0x1d0] sm:$0xff]
    %v111 = vld [vmem:[#allocation6 + $0x1d8] sm:$0xff]
    %v112 = vld [vmem:[#allocation6 + $0x1e0] sm:$0xff]
    %v113 = vld [vmem:[#allocation6 + $0x1e8] sm:$0xff]
    %v114 = vld [vmem:[#allocation6 + $0x1f0] sm:$0xff]
    %v115 = vld [vmem:[#allocation6 + $0x1f8] sm:$0xff]
    %v116 = vld [vmem:[#allocation6 + $0x200] sm:$0xff]
    %v117 = vld [vmem:[#allocation6 + $0x208] sm:$0xff]
    %v118 = vld [vmem:[#allocation6 + $0x210] sm:$0xff]
    %v119 = vld [vmem:[#allocation6 + $0x218] sm:$0xff]
    %v120 = vld [vmem:[#allocation6 + $0x220] sm:$0xff]
    %v121 = vld [vmem:[#allocation6 + $0x228] sm:$0xff]
    %v122 = vld [vmem:[#allocation6 + $0x230] sm:$0xff]
    %v123 = vld [vmem:[#allocation6 + $0x238] sm:$0xff]
    %v124 = vld [vmem:[#allocation6 + $0x240] sm:$0xff]
    %v125 = vld [vmem:[#allocation6 + $0x248] sm:$0xff]
    %v126 = vld [vmem:[#allocation6 + $0x250] sm:$0xff]
    %v127 = vld [vmem:[#allocation6 + $0x258] sm:$0xff]
    %v128 = vld [vmem:[#allocation6 + $0x260] sm:$0xff]
    %v129 = vld [vmem:[#allocation6 + $0x268] sm:$0xff]
    %v130 = vld [vmem:[#allocation6 + $0x270] sm:$0xff]
    %v131 = vld [vmem:[#allocation6 + $0x278] sm:$0xff]
    %v132 = vld [vmem:[#allocation6 + $0x280] sm:$0xff]
    %v133 = vld [vmem:[#allocation6 + $0x288] sm:$0xff]
    %v134 = vld [vmem:[#allocation6 + $0x290] sm:$0xff]
    %v135 = vld [vmem:[#allocation6 + $0x298] sm:$0xff]
    %v136 = vld [vmem:[#allocation6 + $0x2a0] sm:$0xff]
    %v137 = vld [vmem:[#allocation6 + $0x2a8] sm:$0xff]
    %v138 = vld [vmem:[#allocation6 + $0x2b0] sm:$0xff]
    %v139 = vld [vmem:[#allocation6 + $0x2b8] sm:$0xff]
    %v140 = vld [vmem:[#allocation6 + $0x2c0] sm:$0xff]
    %v141 = vld [vmem:[#allocation6 + $0x2c8] sm:$0xff]
    %v142 = vld [vmem:[#allocation6 + $0x2d0] sm:$0xff]
    %v143 = vld [vmem:[#allocation6 + $0x2d8] sm:$0xff]
    %v144 = vld [vmem:[#allocation6 + $0x2e0] sm:$0xff]
    %v145 = vld [vmem:[#allocation6 + $0x2e8] sm:$0xff]
    %v146 = vld [vmem:[#allocation6 + $0x2f0] sm:$0xff]
    %v147 = vld [vmem:[#allocation6 + $0x2f8] sm:$0xff]
    %v148 = vld [vmem:[#allocation6 + $0x300] sm:$0xff]
    %v149 = vld [vmem:[#allocation6 + $0x308] sm:$0xff]
    %v150 = vld [vmem:[#allocation6 + $0x310] sm:$0xff]
    %v151 = vld [vmem:[#allocation6 + $0x318] sm:$0xff]
    %v152 = vld [vmem:[#allocation6 + $0x320] sm:$0xff]
    %v153 = vld [vmem:[#allocation6 + $0x328] sm:$0xff]
    %v154 = vld [vmem:[#allocation6 + $0x330] sm:$0xff]
    %v155 = vld [vmem:[#allocation6 + $0x338] sm:$0xff]
    %v156 = vld [vmem:[#allocation6 + $0x340] sm:$0xff]
    %v157 = vld [vmem:[#allocation6 + $0x348] sm:$0xff]
    %v158 = vld [vmem:[#allocation6 + $0x350] sm:$0xff]
    %v159 = vld [vmem:[#allocation6 + $0x358] sm:$0xff]
    %v160 = vld [vmem:[#allocation6 + $0x360] sm:$0xff]
    %v161 = vld [vmem:[#allocation6 + $0x368] sm:$0xff]
    %v162 = vld [vmem:[#allocation6 + $0x370] sm:$0xff]
    %v163 = vld [vmem:[#allocation6 + $0x378] sm:$0xff]
    %v164 = vld [vmem:[#allocation6 + $0x380] sm:$0xff]
    %v165 = vld [vmem:[#allocation6 + $0x388] sm:$0xff]
    %v166 = vld [vmem:[#allocation6 + $0x390] sm:$0xff]
    %v167 = vld [vmem:[#allocation6 + $0x398] sm:$0xff]
    %v168 = vld [vmem:[#allocation6 + $0x3a0] sm:$0xff]
    %v169 = vld [vmem:[#allocation6 + $0x3a8] sm:$0xff]
    %v170 = vld [vmem:[#allocation6 + $0x3b0] sm:$0xff]
    %v171 = vld [vmem:[#allocation6 + $0x3b8] sm:$0xff]
    %v172 = vld [vmem:[#allocation6 + $0x3c0] sm:$0xff]
    %v173 = vld [vmem:[#allocation6 + $0x3c8] sm:$0xff]
    %v174 = vld [vmem:[#allocation6 + $0x3d0] sm:$0xff]
    %v175 = vld [vmem:[#allocation6 + $0x3d8] sm:$0xff]
    %v176 = vld [vmem:[#allocation6 + $0x3e0] sm:$0xff]
    %v177 = vld [vmem:[#allocation6 + $0x3e8] sm:$0xff]
    %v178 = vld [vmem:[#allocation6 + $0x3f0] sm:$0xff]
    %v179 = vld [vmem:[#allocation6 + $0x3f8] sm:$0xff]
    %v180 = vld [vmem:[%s3] sm:$0x3]
    %v182 = vperm.slane %v180, 0
    %v183 = vperm.slane %v180, 1
    %v190 = vunpack.c.l.b16 %v48
    %v191 = vunpack.c.h.b16 %v48
    %v192 = vunpack.c.l.b16 %v49
    %v193 = vunpack.c.h.b16 %v49
    %v194 = vunpack.c.l.b16 %v50
    %v195 = vunpack.c.h.b16 %v50
    %v196 = vunpack.c.l.b16 %v51
    %v197 = vunpack.c.h.b16 %v51
    %v198 = vpack.c.b16 %v190, %v190
    %v199 = vpack.c.b16 %v191, %v191
    %v200 = vpack.c.b16 %v192, %v192
    %v201 = vpack.c.b16 %v193, %v193
    %v202 = vpack.c.b16 %v194, %v194
    %v203 = vpack.c.b16 %v195, %v195
    %v204 = vpack.c.b16 %v196, %v196
    %v205 = vpack.c.b16 %v197, %v197
    %v342 = vunpack.c.l.b16 %v52
    %v343 = vunpack.c.h.b16 %v52
    %v344 = vunpack.c.l.b16 %v53
    %v345 = vunpack.c.h.b16 %v53
    %v346 = vunpack.c.l.b16 %v54
    %v347 = vunpack.c.h.b16 %v54
    %v348 = vunpack.c.l.b16 %v55
    %v349 = vunpack.c.h.b16 %v55
    %v350 = vunpack.c.l.b16 %v56
    %v351 = vunpack.c.h.b16 %v56
    %v352 = vunpack.c.l.b16 %v57
    %v353 = vunpack.c.h.b16 %v57
    %v354 = vunpack.c.l.b16 %v58
    %v355 = vunpack.c.h.b16 %v58
    %v356 = vunpack.c.l.b16 %v59
    %v357 = vunpack.c.h.b16 %v59
    %v358 = vunpack.c.l.b16 %v60
    %v359 = vunpack.c.h.b16 %v60
    %v360 = vunpack.c.l.b16 %v61
    %v361 = vunpack.c.h.b16 %v61
    %v362 = vunpack.c.l.b16 %v62
    %v363 = vunpack.c.h.b16 %v62
    %v364 = vunpack.c.l.b16 %v63
    %v365 = vunpack.c.h.b16 %v63
    %v366 = vunpack.c.l.b16 %v64
    %v367 = vunpack.c.h.b16 %v64
    %v368 = vunpack.c.l.b16 %v65
    %v369 = vunpack.c.h.b16 %v65
    %v370 = vunpack.c.l.b16 %v66
    %v371 = vunpack.c.h.b16 %v66
    %v372 = vunpack.c.l.b16 %v67
    %v373 = vunpack.c.h.b16 %v67
    %v374 = vunpack.c.l.b16 %v68
    %v375 = vunpack.c.h.b16 %v68
    %v376 = vunpack.c.l.b16 %v69
    %v377 = vunpack.c.h.b16 %v69
    %v378 = vunpack.c.l.b16 %v70
    %v379 = vunpack.c.h.b16 %v70
    %v380 = vunpack.c.l.b16 %v71
    %v381 = vunpack.c.h.b16 %v71
    %v382 = vunpack.c.l.b16 %v72
    %v383 = vunpack.c.h.b16 %v72
    %v384 = vunpack.c.l.b16 %v73
    %v385 = vunpack.c.h.b16 %v73
    %v386 = vunpack.c.l.b16 %v74
    %v387 = vunpack.c.h.b16 %v74
    %v388 = vunpack.c.l.b16 %v75
    %v389 = vunpack.c.h.b16 %v75
    %v390 = vunpack.c.l.b16 %v76
    %v391 = vunpack.c.h.b16 %v76
    %v392 = vunpack.c.l.b16 %v77
    %v393 = vunpack.c.h.b16 %v77
    %v394 = vunpack.c.l.b16 %v78
    %v395 = vunpack.c.h.b16 %v78
    %v396 = vunpack.c.l.b16 %v79
    %v397 = vunpack.c.h.b16 %v79
    %v398 = vunpack.c.l.b16 %v80
    %v399 = vunpack.c.h.b16 %v80
    %v400 = vunpack.c.l.b16 %v81
    %v401 = vunpack.c.h.b16 %v81
    %v402 = vunpack.c.l.b16 %v82
    %v403 = vunpack.c.h.b16 %v82
    %v404 = vunpack.c.l.b16 %v83
    %v405 = vunpack.c.h.b16 %v83
    %v406 = vunpack.c.l.b16 %v84
    %v407 = vunpack.c.h.b16 %v84
    %v408 = vunpack.c.l.b16 %v85
    %v409 = vunpack.c.h.b16 %v85
    %v410 = vunpack.c.l.b16 %v86
    %v411 = vunpack.c.h.b16 %v86
    %v412 = vunpack.c.l.b16 %v87
    %v413 = vunpack.c.h.b16 %v87
    %v414 = vunpack.c.l.b16 %v88
    %v415 = vunpack.c.h.b16 %v88
    %v416 = vunpack.c.l.b16 %v89
    %v417 = vunpack.c.h.b16 %v89
    %v418 = vunpack.c.l.b16 %v90
    %v419 = vunpack.c.h.b16 %v90
    %v420 = vunpack.c.l.b16 %v91
    %v421 = vunpack.c.h.b16 %v91
    %v422 = vunpack.c.l.b16 %v92
    %v423 = vunpack.c.h.b16 %v92
    %v424 = vunpack.c.l.b16 %v93
    %v425 = vunpack.c.h.b16 %v93
    %v426 = vunpack.c.l.b16 %v94
    %v427 = vunpack.c.h.b16 %v94
    %v428 = vunpack.c.l.b16 %v95
    %v429 = vunpack.c.h.b16 %v95
    %v430 = vunpack.c.l.b16 %v96
    %v431 = vunpack.c.h.b16 %v96
    %v432 = vunpack.c.l.b16 %v97
    %v433 = vunpack.c.h.b16 %v97
    %v434 = vunpack.c.l.b16 %v98
    %v435 = vunpack.c.h.b16 %v98
    %v436 = vunpack.c.l.b16 %v99
    %v437 = vunpack.c.h.b16 %v99
    %v438 = vunpack.c.l.b16 %v100
    %v439 = vunpack.c.h.b16 %v100
    %v440 = vunpack.c.l.b16 %v101
    %v441 = vunpack.c.h.b16 %v101
    %v442 = vunpack.c.l.b16 %v102
    %v443 = vunpack.c.h.b16 %v102
    %v444 = vunpack.c.l.b16 %v103
    %v445 = vunpack.c.h.b16 %v103
    %v446 = vunpack.c.l.b16 %v104
    %v447 = vunpack.c.h.b16 %v104
    %v448 = vunpack.c.l.b16 %v105
    %v449 = vunpack.c.h.b16 %v105
    %v450 = vunpack.c.l.b16 %v106
    %v451 = vunpack.c.h.b16 %v106
    %v452 = vunpack.c.l.b16 %v107
    %v453 = vunpack.c.h.b16 %v107
    %v454 = vunpack.c.l.b16 %v108
    %v455 = vunpack.c.h.b16 %v108
    %v456 = vunpack.c.l.b16 %v109
    %v457 = vunpack.c.h.b16 %v109
    %v458 = vunpack.c.l.b16 %v110
    %v459 = vunpack.c.h.b16 %v110
    %v460 = vunpack.c.l.b16 %v111
    %v461 = vunpack.c.h.b16 %v111
    %v462 = vunpack.c.l.b16 %v112
    %v463 = vunpack.c.h.b16 %v112
    %v464 = vunpack.c.l.b16 %v113
    %v465 = vunpack.c.h.b16 %v113
    %v466 = vunpack.c.l.b16 %v114
    %v467 = vunpack.c.h.b16 %v114
    %v468 = vunpack.c.l.b16 %v115
    %v469 = vunpack.c.h.b16 %v115
    %v470 = vunpack.c.l.b16 %v116
    %v471 = vunpack.c.h.b16 %v116
    %v472 = vunpack.c.l.b16 %v117
    %v473 = vunpack.c.h.b16 %v117
    %v474 = vunpack.c.l.b16 %v118
    %v475 = vunpack.c.h.b16 %v118
    %v476 = vunpack.c.l.b16 %v119
    %v477 = vunpack.c.h.b16 %v119
    %v478 = vunpack.c.l.b16 %v120
    %v479 = vunpack.c.h.b16 %v120
    %v480 = vunpack.c.l.b16 %v121
    %v481 = vunpack.c.h.b16 %v121
    %v482 = vunpack.c.l.b16 %v122
    %v483 = vunpack.c.h.b16 %v122
    %v484 = vunpack.c.l.b16 %v123
    %v485 = vunpack.c.h.b16 %v123
    %v486 = vunpack.c.l.b16 %v124
    %v487 = vunpack.c.h.b16 %v124
    %v488 = vunpack.c.l.b16 %v125
    %v489 = vunpack.c.h.b16 %v125
    %v490 = vunpack.c.l.b16 %v126
    %v491 = vunpack.c.h.b16 %v126
    %v492 = vunpack.c.l.b16 %v127
    %v493 = vunpack.c.h.b16 %v127
    %v494 = vunpack.c.l.b16 %v128
    %v495 = vunpack.c.h.b16 %v128
    %v496 = vunpack.c.l.b16 %v129
    %v497 = vunpack.c.h.b16 %v129
    %v498 = vunpack.c.l.b16 %v130
    %v499 = vunpack.c.h.b16 %v130
    %v500 = vunpack.c.l.b16 %v131
    %v501 = vunpack.c.h.b16 %v131
    %v502 = vunpack.c.l.b16 %v132
    %v503 = vunpack.c.h.b16 %v132
    %v504 = vunpack.c.l.b16 %v133
    %v505 = vunpack.c.h.b16 %v133
    %v506 = vunpack.c.l.b16 %v134
    %v507 = vunpack.c.h.b16 %v134
    %v508 = vunpack.c.l.b16 %v135
    %v509 = vunpack.c.h.b16 %v135
    %v510 = vunpack.c.l.b16 %v136
    %v511 = vunpack.c.h.b16 %v136
    %v512 = vunpack.c.l.b16 %v137
    %v513 = vunpack.c.h.b16 %v137
    %v514 = vunpack.c.l.b16 %v138
    %v515 = vunpack.c.h.b16 %v138
    %v516 = vunpack.c.l.b16 %v139
    %v517 = vunpack.c.h.b16 %v139
    %v518 = vunpack.c.l.b16 %v140
    %v519 = vunpack.c.h.b16 %v140
    %v520 = vunpack.c.l.b16 %v141
    %v521 = vunpack.c.h.b16 %v141
    %v522 = vunpack.c.l.b16 %v142
    %v523 = vunpack.c.h.b16 %v142
    %v524 = vunpack.c.l.b16 %v143
    %v525 = vunpack.c.h.b16 %v143
    %v526 = vunpack.c.l.b16 %v144
    %v527 = vunpack.c.h.b16 %v144
    %v528 = vunpack.c.l.b16 %v145
    %v529 = vunpack.c.h.b16 %v145
    %v530 = vunpack.c.l.b16 %v146
    %v531 = vunpack.c.h.b16 %v146
    %v532 = vunpack.c.l.b16 %v147
    %v533 = vunpack.c.h.b16 %v147
    %v534 = vunpack.c.l.b16 %v148
    %v535 = vunpack.c.h.b16 %v148
    %v536 = vunpack.c.l.b16 %v149
    %v537 = vunpack.c.h.b16 %v149
    %v538 = vunpack.c.l.b16 %v150
    %v539 = vunpack.c.h.b16 %v150
    %v540 = vunpack.c.l.b16 %v151
    %v541 = vunpack.c.h.b16 %v151
    %v542 = vunpack.c.l.b16 %v152
    %v543 = vunpack.c.h.b16 %v152
    %v544 = vunpack.c.l.b16 %v153
    %v545 = vunpack.c.h.b16 %v153
    %v546 = vunpack.c.l.b16 %v154
    %v547 = vunpack.c.h.b16 %v154
    %v548 = vunpack.c.l.b16 %v155
    %v549 = vunpack.c.h.b16 %v155
    %v550 = vunpack.c.l.b16 %v156
    %v551 = vunpack.c.h.b16 %v156
    %v552 = vunpack.c.l.b16 %v157
    %v553 = vunpack.c.h.b16 %v157
    %v554 = vunpack.c.l.b16 %v158
    %v555 = vunpack.c.h.b16 %v158
    %v556 = vunpack.c.l.b16 %v159
    %v557 = vunpack.c.h.b16 %v159
    %v558 = vunpack.c.l.b16 %v160
    %v559 = vunpack.c.h.b16 %v160
    %v560 = vunpack.c.l.b16 %v161
    %v561 = vunpack.c.h.b16 %v161
    %v562 = vunpack.c.l.b16 %v162
    %v563 = vunpack.c.h.b16 %v162
    %v564 = vunpack.c.l.b16 %v163
    %v565 = vunpack.c.h.b16 %v163
    %v566 = vunpack.c.l.b16 %v164
    %v567 = vunpack.c.h.b16 %v164
    %v568 = vunpack.c.l.b16 %v165
    %v569 = vunpack.c.h.b16 %v165
    %v570 = vunpack.c.l.b16 %v166
    %v571 = vunpack.c.h.b16 %v166
    %v572 = vunpack.c.l.b16 %v167
    %v573 = vunpack.c.h.b16 %v167
    %v574 = vunpack.c.l.b16 %v168
    %v575 = vunpack.c.h.b16 %v168
    %v576 = vunpack.c.l.b16 %v169
    %v577 = vunpack.c.h.b16 %v169
    %v578 = vunpack.c.l.b16 %v170
    %v579 = vunpack.c.h.b16 %v170
    %v580 = vunpack.c.l.b16 %v171
    %v581 = vunpack.c.h.b16 %v171
    %v582 = vunpack.c.l.b16 %v172
    %v583 = vunpack.c.h.b16 %v172
    %v584 = vunpack.c.l.b16 %v173
    %v585 = vunpack.c.h.b16 %v173
    %v586 = vunpack.c.l.b16 %v174
    %v587 = vunpack.c.h.b16 %v174
    %v588 = vunpack.c.l.b16 %v175
    %v589 = vunpack.c.h.b16 %v175
    %v590 = vunpack.c.l.b16 %v176
    %v591 = vunpack.c.h.b16 %v176
    %v592 = vunpack.c.l.b16 %v177
    %v593 = vunpack.c.h.b16 %v177
    %v594 = vunpack.c.l.b16 %v178
    %v595 = vunpack.c.h.b16 %v178
    %v596 = vunpack.c.l.b16 %v179
    %v597 = vunpack.c.h.b16 %v179
    %v598 = vpack.c.b16 %v344, %v342
    %v599 = vpack.c.b16 %v345, %v343
    %v600 = vpack.c.b16 %v348, %v346
    %v601 = vpack.c.b16 %v349, %v347
    %v602 = vpack.c.b16 %v352, %v350
    %v603 = vpack.c.b16 %v353, %v351
    %v604 = vpack.c.b16 %v356, %v354
    %v605 = vpack.c.b16 %v357, %v355
    %v606 = vpack.c.b16 %v360, %v358
    %v607 = vpack.c.b16 %v361, %v359
    %v608 = vpack.c.b16 %v364, %v362
    %v609 = vpack.c.b16 %v365, %v363
    %v610 = vpack.c.b16 %v368, %v366
    %v611 = vpack.c.b16 %v369, %v367
    %v612 = vpack.c.b16 %v372, %v370
    %v613 = vpack.c.b16 %v373, %v371
    %v614 = vpack.c.b16 %v376, %v374
    %v615 = vpack.c.b16 %v377, %v375
    %v616 = vpack.c.b16 %v380, %v378
    %v617 = vpack.c.b16 %v381, %v379
    %v618 = vpack.c.b16 %v384, %v382
    %v619 = vpack.c.b16 %v385, %v383
    %v620 = vpack.c.b16 %v388, %v386
    %v621 = vpack.c.b16 %v389, %v387
    %v622 = vpack.c.b16 %v392, %v390
    %v623 = vpack.c.b16 %v393, %v391
    %v624 = vpack.c.b16 %v396, %v394
    %v625 = vpack.c.b16 %v397, %v395
    %v626 = vpack.c.b16 %v400, %v398
    %v627 = vpack.c.b16 %v401, %v399
    %v628 = vpack.c.b16 %v404, %v402
    %v629 = vpack.c.b16 %v405, %v403
    %v630 = vpack.c.b16 %v408, %v406
    %v631 = vpack.c.b16 %v409, %v407
    %v632 = vpack.c.b16 %v412, %v410
    %v633 = vpack.c.b16 %v413, %v411
    %v634 = vpack.c.b16 %v416, %v414
    %v635 = vpack.c.b16 %v417, %v415
    %v636 = vpack.c.b16 %v420, %v418
    %v637 = vpack.c.b16 %v421, %v419
    %v638 = vpack.c.b16 %v424, %v422
    %v639 = vpack.c.b16 %v425, %v423
    %v640 = vpack.c.b16 %v428, %v426
    %v641 = vpack.c.b16 %v429, %v427
    %v642 = vpack.c.b16 %v432, %v430
    %v643 = vpack.c.b16 %v433, %v431
    %v644 = vpack.c.b16 %v436, %v434
    %v645 = vpack.c.b16 %v437, %v435
    %v646 = vpack.c.b16 %v440, %v438
    %v647 = vpack.c.b16 %v441, %v439
    %v648 = vpack.c.b16 %v444, %v442
    %v649 = vpack.c.b16 %v445, %v443
    %v650 = vpack.c.b16 %v448, %v446
    %v651 = vpack.c.b16 %v449, %v447
    %v652 = vpack.c.b16 %v452, %v450
    %v653 = vpack.c.b16 %v453, %v451
    %v654 = vpack.c.b16 %v456, %v454
    %v655 = vpack.c.b16 %v457, %v455
    %v656 = vpack.c.b16 %v460, %v458
    %v657 = vpack.c.b16 %v461, %v459
    %v658 = vpack.c.b16 %v464, %v462
    %v659 = vpack.c.b16 %v465, %v463
    %v660 = vpack.c.b16 %v468, %v466
    %v661 = vpack.c.b16 %v469, %v467
    %v662 = vpack.c.b16 %v472, %v470
    %v663 = vpack.c.b16 %v473, %v471
    %v664 = vpack.c.b16 %v476, %v474
    %v665 = vpack.c.b16 %v477, %v475
    %v666 = vpack.c.b16 %v480, %v478
    %v667 = vpack.c.b16 %v481, %v479
    %v668 = vpack.c.b16 %v484, %v482
    %v669 = vpack.c.b16 %v485, %v483
    %v670 = vpack.c.b16 %v488, %v486
    %v671 = vpack.c.b16 %v489, %v487
    %v672 = vpack.c.b16 %v492, %v490
    %v673 = vpack.c.b16 %v493, %v491
    %v674 = vpack.c.b16 %v496, %v494
    %v675 = vpack.c.b16 %v497, %v495
    %v676 = vpack.c.b16 %v500, %v498
    %v677 = vpack.c.b16 %v501, %v499
    %v678 = vpack.c.b16 %v504, %v502
    %v679 = vpack.c.b16 %v505, %v503
    %v680 = vpack.c.b16 %v508, %v506
    %v681 = vpack.c.b16 %v509, %v507
    %v682 = vpack.c.b16 %v512, %v510
    %v683 = vpack.c.b16 %v513, %v511
    %v684 = vpack.c.b16 %v516, %v514
    %v685 = vpack.c.b16 %v517, %v515
    %v686 = vpack.c.b16 %v520, %v518
    %v687 = vpack.c.b16 %v521, %v519
    %v688 = vpack.c.b16 %v524, %v522
    %v689 = vpack.c.b16 %v525, %v523
    %v690 = vpack.c.b16 %v528, %v526
    %v691 = vpack.c.b16 %v529, %v527
    %v692 = vpack.c.b16 %v532, %v530
    %v693 = vpack.c.b16 %v533, %v531
    %v694 = vpack.c.b16 %v536, %v534
    %v695 = vpack.c.b16 %v537, %v535
    %v696 = vpack.c.b16 %v540, %v538
    %v697 = vpack.c.b16 %v541, %v539
    %v698 = vpack.c.b16 %v544, %v542
    %v699 = vpack.c.b16 %v545, %v543
    %v700 = vpack.c.b16 %v548, %v546
    %v701 = vpack.c.b16 %v549, %v547
    %v702 = vpack.c.b16 %v552, %v550
    %v703 = vpack.c.b16 %v553, %v551
    %v704 = vpack.c.b16 %v556, %v554
    %v705 = vpack.c.b16 %v557, %v555
    %v706 = vpack.c.b16 %v560, %v558
    %v707 = vpack.c.b16 %v561, %v559
    %v708 = vpack.c.b16 %v564, %v562
    %v709 = vpack.c.b16 %v565, %v563
    %v710 = vpack.c.b16 %v568, %v566
    %v711 = vpack.c.b16 %v569, %v567
    %v712 = vpack.c.b16 %v572, %v570
    %v713 = vpack.c.b16 %v573, %v571
    %v714 = vpack.c.b16 %v576, %v574
    %v715 = vpack.c.b16 %v577, %v575
    %v716 = vpack.c.b16 %v580, %v578
    %v717 = vpack.c.b16 %v581, %v579
    %v718 = vpack.c.b16 %v584, %v582
    %v719 = vpack.c.b16 %v585, %v583
    %v720 = vpack.c.b16 %v588, %v586
    %v721 = vpack.c.b16 %v589, %v587
    %v722 = vpack.c.b16 %v592, %v590
    %v723 = vpack.c.b16 %v593, %v591
    %v724 = vpack.c.b16 %v596, %v594
    %v725 = vpack.c.b16 %v597, %v595
    %854 = vmatpush.bf16.msra.mxu0 %v612
    %855 = vmatpush.bf16.msra.mxu0 %v610
    %856 = vmatpush.bf16.msra.mxu0 %v608
    %857 = vmatpush.bf16.msra.mxu0 %v606
    %858 = vmatpush.bf16.msra.mxu0 %v604
    %859 = vmatpush.bf16.msra.mxu0 %v602
    %860 = vmatpush.bf16.msra.mxu0 %v600
    %861 = vmatpush.bf16.msra.mxu0 %v598
    %862 = vmatmul.bf16.gmra.mxu0 %v198
    %v863 = vpop.f32.mrf.mxu0
    %v864 = vadd.f32 %v182, %v863
    %v865 = vpop.f32.mrf.mxu0
    %866 = vdwg.mxu0
    %867 = vmatpush.bf16.msra.mxu0 %v628
    %868 = vmatpush.bf16.msra.mxu0 %v626
    %869 = vmatpush.bf16.msra.mxu0 %v624
    %870 = vmatpush.bf16.msra.mxu0 %v622
    %871 = vmatpush.bf16.msra.mxu0 %v620
    %872 = vmatpush.bf16.msra.mxu0 %v618
    %873 = vmatpush.bf16.msra.mxu0 %v616
    %874 = vmatpush.bf16.msra.mxu0 %v614
    %875 = vmatmul.bf16.gmra.mxu0 %v199
    %v876 = vpop.f32.mrf.mxu0
    %v877 = vadd.f32 %v864, %v876
    %v878 = vpop.f32.mrf.mxu0
    %879 = vdwg.mxu0
    %880 = vmatpush.bf16.msra.mxu0 %v644
    %881 = vmatpush.bf16.msra.mxu0 %v642
    %882 = vmatpush.bf16.msra.mxu0 %v640
    %883 = vmatpush.bf16.msra.mxu0 %v638
    %884 = vmatpush.bf16.msra.mxu0 %v636
    %885 = vmatpush.bf16.msra.mxu0 %v634
    %886 = vmatpush.bf16.msra.mxu0 %v632
    %887 = vmatpush.bf16.msra.mxu0 %v630
    %888 = vmatmul.bf16.gmra.mxu0 %v200
    %v889 = vpop.f32.mrf.mxu0
    %v890 = vadd.f32 %v877, %v889
    %v891 = vpop.f32.mrf.mxu0
    %892 = vdwg.mxu0
    %893 = vmatpush.bf16.msra.mxu0 %v660
    %894 = vmatpush.bf16.msra.mxu0 %v658
    %895 = vmatpush.bf16.msra.mxu0 %v656
    %896 = vmatpush.bf16.msra.mxu0 %v654
    %897 = vmatpush.bf16.msra.mxu0 %v652
    %898 = vmatpush.bf16.msra.mxu0 %v650
    %899 = vmatpush.bf16.msra.mxu0 %v648
    %900 = vmatpush.bf16.msra.mxu0 %v646
    %901 = vmatmul.bf16.gmra.mxu0 %v201
    %v902 = vpop.f32.mrf.mxu0
    %v903 = vadd.f32 %v890, %v902
    %v904 = vpop.f32.mrf.mxu0
    %905 = vdwg.mxu0
    %906 = vmatpush.bf16.msra.mxu0 %v676
    %907 = vmatpush.bf16.msra.mxu0 %v674
    %908 = vmatpush.bf16.msra.mxu0 %v672
    %909 = vmatpush.bf16.msra.mxu0 %v670
    %910 = vmatpush.bf16.msra.mxu0 %v668
    %911 = vmatpush.bf16.msra.mxu0 %v666
    %912 = vmatpush.bf16.msra.mxu0 %v664
    %913 = vmatpush.bf16.msra.mxu0 %v662
    %914 = vmatmul.bf16.gmra.mxu0 %v202
    %v915 = vpop.f32.mrf.mxu0
    %v916 = vadd.f32 %v903, %v915
    %v917 = vpop.f32.mrf.mxu0
    %918 = vdwg.mxu0
    %919 = vmatpush.bf16.msra.mxu0 %v692
    %920 = vmatpush.bf16.msra.mxu0 %v690
    %921 = vmatpush.bf16.msra.mxu0 %v688
    %922 = vmatpush.bf16.msra.mxu0 %v686
    %923 = vmatpush.bf16.msra.mxu0 %v684
    %924 = vmatpush.bf16.msra.mxu0 %v682
    %925 = vmatpush.bf16.msra.mxu0 %v680
    %926 = vmatpush.bf16.msra.mxu0 %v678
    %927 = vmatmul.bf16.gmra.mxu0 %v203
    %v928 = vpop.f32.mrf.mxu0
    %v929 = vadd.f32 %v916, %v928
    %v930 = vpop.f32.mrf.mxu0
    %931 = vdwg.mxu0
    %932 = vmatpush.bf16.msra.mxu0 %v708
    %933 = vmatpush.bf16.msra.mxu0 %v706
    %934 = vmatpush.bf16.msra.mxu0 %v704
    %935 = vmatpush.bf16.msra.mxu0 %v702
    %936 = vmatpush.bf16.msra.mxu0 %v700
    %937 = vmatpush.bf16.msra.mxu0 %v698
    %938 = vmatpush.bf16.msra.mxu0 %v696
    %939 = vmatpush.bf16.msra.mxu0 %v694
    %940 = vmatmul.bf16.gmra.mxu0 %v204
    %v941 = vpop.f32.mrf.mxu0
    %v942 = vadd.f32 %v929, %v941
    %v943 = vpop.f32.mrf.mxu0
    %944 = vdwg.mxu0
    %945 = vmatpush.bf16.msra.mxu0 %v724
    %946 = vmatpush.bf16.msra.mxu0 %v722
    %947 = vmatpush.bf16.msra.mxu0 %v720
    %948 = vmatpush.bf16.msra.mxu0 %v718
    %949 = vmatpush.bf16.msra.mxu0 %v716
    %950 = vmatpush.bf16.msra.mxu0 %v714
    %951 = vmatpush.bf16.msra.mxu0 %v712
    %952 = vmatpush.bf16.msra.mxu0 %v710
    %953 = vmatmul.bf16.gmra.mxu0 %v205
    %v954 = vpop.f32.mrf.mxu0
    %v955 = vadd.f32 %v942, %v954
    %v956 = vpop.f32.mrf.mxu0
    %957 = vdwg.mxu0
    %958 = vmatpush.bf16.msra.mxu0 %v613
    %959 = vmatpush.bf16.msra.mxu0 %v611
    %960 = vmatpush.bf16.msra.mxu0 %v609
    %961 = vmatpush.bf16.msra.mxu0 %v607
    %962 = vmatpush.bf16.msra.mxu0 %v605
    %963 = vmatpush.bf16.msra.mxu0 %v603
    %964 = vmatpush.bf16.msra.mxu0 %v601
    %965 = vmatpush.bf16.msra.mxu0 %v599
    %966 = vmatmul.bf16.gmra.mxu0 %v198
    %v967 = vpop.f32.mrf.mxu0
    %v968 = vadd.f32 %v183, %v967
    %v969 = vpop.f32.mrf.mxu0
    %970 = vdwg.mxu0
    %971 = vmatpush.bf16.msra.mxu0 %v629
    %972 = vmatpush.bf16.msra.mxu0 %v627
    %973 = vmatpush.bf16.msra.mxu0 %v625
    %974 = vmatpush.bf16.msra.mxu0 %v623
    %975 = vmatpush.bf16.msra.mxu0 %v621
    %976 = vmatpush.bf16.msra.mxu0 %v619
    %977 = vmatpush.bf16.msra.mxu0 %v617
    %978 = vmatpush.bf16.msra.mxu0 %v615
    %979 = vmatmul.bf16.gmra.mxu0 %v199
    %v980 = vpop.f32.mrf.mxu0
    %v981 = vadd.f32 %v968, %v980
    %v982 = vpop.f32.mrf.mxu0
    %983 = vdwg.mxu0
    %984 = vmatpush.bf16.msra.mxu0 %v645
    %985 = vmatpush.bf16.msra.mxu0 %v643
    %986 = vmatpush.bf16.msra.mxu0 %v641
    %987 = vmatpush.bf16.msra.mxu0 %v639
    %988 = vmatpush.bf16.msra.mxu0 %v637
    %989 = vmatpush.bf16.msra.mxu0 %v635
    %990 = vmatpush.bf16.msra.mxu0 %v633
    %991 = vmatpush.bf16.msra.mxu0 %v631
    %992 = vmatmul.bf16.gmra.mxu0 %v200
    %v993 = vpop.f32.mrf.mxu0
    %v994 = vadd.f32 %v981, %v993
    %v995 = vpop.f32.mrf.mxu0
    %996 = vdwg.mxu0
    %997 = vmatpush.bf16.msra.mxu0 %v661
    %998 = vmatpush.bf16.msra.mxu0 %v659
    %999 = vmatpush.bf16.msra.mxu0 %v657
    %1000 = vmatpush.bf16.msra.mxu0 %v655
    %1001 = vmatpush.bf16.msra.mxu0 %v653
    %1002 = vmatpush.bf16.msra.mxu0 %v651
    %1003 = vmatpush.bf16.msra.mxu0 %v649
    %1004 = vmatpush.bf16.msra.mxu0 %v647
    %1005 = vmatmul.bf16.gmra.mxu0 %v201
    %v1006 = vpop.f32.mrf.mxu0
    %v1007 = vadd.f32 %v994, %v1006
    %v1008 = vpop.f32.mrf.mxu0
    %1009 = vdwg.mxu0
    %1010 = vmatpush.bf16.msra.mxu0 %v677
    %1011 = vmatpush.bf16.msra.mxu0 %v675
    %1012 = vmatpush.bf16.msra.mxu0 %v673
    %1013 = vmatpush.bf16.msra.mxu0 %v671
    %1014 = vmatpush.bf16.msra.mxu0 %v669
    %1015 = vmatpush.bf16.msra.mxu0 %v667
    %1016 = vmatpush.bf16.msra.mxu0 %v665
    %1017 = vmatpush.bf16.msra.mxu0 %v663
    %1018 = vmatmul.bf16.gmra.mxu0 %v202
    %v1019 = vpop.f32.mrf.mxu0
    %v1020 = vadd.f32 %v1007, %v1019
    %v1021 = vpop.f32.mrf.mxu0
    %1022 = vdwg.mxu0
    %1023 = vmatpush.bf16.msra.mxu0 %v693
    %1024 = vmatpush.bf16.msra.mxu0 %v691
    %1025 = vmatpush.bf16.msra.mxu0 %v689
    %1026 = vmatpush.bf16.msra.mxu0 %v687
    %1027 = vmatpush.bf16.msra.mxu0 %v685
    %1028 = vmatpush.bf16.msra.mxu0 %v683
    %1029 = vmatpush.bf16.msra.mxu0 %v681
    %1030 = vmatpush.bf16.msra.mxu0 %v679
    %1031 = vmatmul.bf16.gmra.mxu0 %v203
    %v1032 = vpop.f32.mrf.mxu0
    %v1033 = vadd.f32 %v1020, %v1032
    %v1034 = vpop.f32.mrf.mxu0
    %1035 = vdwg.mxu0
    %1036 = vmatpush.bf16.msra.mxu0 %v709
    %1037 = vmatpush.bf16.msra.mxu0 %v707
    %1038 = vmatpush.bf16.msra.mxu0 %v705
    %1039 = vmatpush.bf16.msra.mxu0 %v703
    %1040 = vmatpush.bf16.msra.mxu0 %v701
    %1041 = vmatpush.bf16.msra.mxu0 %v699
    %1042 = vmatpush.bf16.msra.mxu0 %v697
    %1043 = vmatpush.bf16.msra.mxu0 %v695
    %1044 = vmatmul.bf16.gmra.mxu0 %v204
    %v1045 = vpop.f32.mrf.mxu0
    %v1046 = vadd.f32 %v1033, %v1045
    %v1047 = vpop.f32.mrf.mxu0
    %1048 = vdwg.mxu0
    %1049 = vmatpush.bf16.msra.mxu0 %v725
    %1050 = vmatpush.bf16.msra.mxu0 %v723
    %1051 = vmatpush.bf16.msra.mxu0 %v721
    %1052 = vmatpush.bf16.msra.mxu0 %v719
    %1053 = vmatpush.bf16.msra.mxu0 %v717
    %1054 = vmatpush.bf16.msra.mxu0 %v715
    %1055 = vmatpush.bf16.msra.mxu0 %v713
    %1056 = vmatpush.bf16.msra.mxu0 %v711
    %1057 = vmatmul.bf16.gmra.mxu0 %v205
    %v1058 = vpop.f32.mrf.mxu0
    %v1059 = vadd.f32 %v1046, %v1058
    %v1060 = vpop.f32.mrf.mxu0
    %1061 = vdwg.mxu0
    %v1062 = vmax.f32 %v955, 0.0
    %v1063 = vmax.f32 %v1059, 0.0
    %v1064 = vpack.c.bf16 %v1062, %v1062
    %v1065 = vpack.c.bf16 %v1063, %v1063
    %v1066 = vld [vmem:[%s4] sm:$0xff]
    %v1067 = vld [vmem:[%s4 + $0x8] sm:$0xff]
    %v1068 = vld [vmem:[%s4 + $0x10] sm:$0xff]
    %v1069 = vld [vmem:[%s4 + $0x18] sm:$0xff]
    %v1070 = vld [vmem:[%s4 + $0x20] sm:$0xff]
    %v1071 = vld [vmem:[%s4 + $0x28] sm:$0xff]
    %v1072 = vld [vmem:[%s4 + $0x30] sm:$0xff]
    %v1073 = vld [vmem:[%s4 + $0x38] sm:$0xff]
    %v1074 = vld [vmem:[%s4 + $0x40] sm:$0xff]
    %v1075 = vld [vmem:[%s4 + $0x48] sm:$0xff]
    %v1076 = vld [vmem:[%s4 + $0x50] sm:$0xff]
    %v1077 = vld [vmem:[%s4 + $0x58] sm:$0xff]
    %v1078 = vld [vmem:[%s4 + $0x60] sm:$0xff]
    %v1079 = vld [vmem:[%s4 + $0x68] sm:$0xff]
    %v1080 = vld [vmem:[%s4 + $0x70] sm:$0xff]
    %v1081 = vld [vmem:[%s4 + $0x78] sm:$0xff]
    %v1082 = vld [vmem:[%s4 + $0x80] sm:$0xff]
    %v1083 = vld [vmem:[%s4 + $0x88] sm:$0xff]
    %v1084 = vld [vmem:[%s4 + $0x90] sm:$0xff]
    %v1085 = vld [vmem:[%s4 + $0x98] sm:$0xff]
    %v1086 = vld [vmem:[%s4 + $0xa0] sm:$0xff]
    %v1087 = vld [vmem:[%s4 + $0xa8] sm:$0xff]
    %v1088 = vld [vmem:[%s4 + $0xb0] sm:$0xff]
    %v1089 = vld [vmem:[%s4 + $0xb8] sm:$0xff]
    %v1090 = vld [vmem:[%s4 + $0xc0] sm:$0xff]
    %v1091 = vld [vmem:[%s4 + $0xc8] sm:$0xff]
    %v1092 = vld [vmem:[%s4 + $0xd0] sm:$0xff]
    %v1093 = vld [vmem:[%s4 + $0xd8] sm:$0xff]
    %v1094 = vld [vmem:[%s4 + $0xe0] sm:$0xff]
    %v1095 = vld [vmem:[%s4 + $0xe8] sm:$0xff]
    %v1096 = vld [vmem:[%s4 + $0xf0] sm:$0xff]
    %v1097 = vld [vmem:[%s4 + $0xf8] sm:$0xff]
    %v1098 = vld [vmem:[%s5] sm:$0x3]
    %v1100 = vperm.slane %v1098, 0
    %v1101 = vperm.slane %v1098, 1
    %v1136 = vunpack.c.l.b16 %v1066
    %v1137 = vunpack.c.h.b16 %v1066
    %v1138 = vunpack.c.l.b16 %v1067
    %v1139 = vunpack.c.h.b16 %v1067
    %v1140 = vunpack.c.l.b16 %v1068
    %v1141 = vunpack.c.h.b16 %v1068
    %v1142 = vunpack.c.l.b16 %v1069
    %v1143 = vunpack.c.h.b16 %v1069
    %v1144 = vunpack.c.l.b16 %v1070
    %v1145 = vunpack.c.h.b16 %v1070
    %v1146 = vunpack.c.l.b16 %v1071
    %v1147 = vunpack.c.h.b16 %v1071
    %v1148 = vunpack.c.l.b16 %v1072
    %v1149 = vunpack.c.h.b16 %v1072
    %v1150 = vunpack.c.l.b16 %v1073
    %v1151 = vunpack.c.h.b16 %v1073
    %v1152 = vunpack.c.l.b16 %v1074
    %v1153 = vunpack.c.h.b16 %v1074
    %v1154 = vunpack.c.l.b16 %v1075
    %v1155 = vunpack.c.h.b16 %v1075
    %v1156 = vunpack.c.l.b16 %v1076
    %v1157 = vunpack.c.h.b16 %v1076
    %v1158 = vunpack.c.l.b16 %v1077
    %v1159 = vunpack.c.h.b16 %v1077
    %v1160 = vunpack.c.l.b16 %v1078
    %v1161 = vunpack.c.h.b16 %v1078
    %v1162 = vunpack.c.l.b16 %v1079
    %v1163 = vunpack.c.h.b16 %v1079
    %v1164 = vunpack.c.l.b16 %v1080
    %v1165 = vunpack.c.h.b16 %v1080
    %v1166 = vunpack.c.l.b16 %v1081
    %v1167 = vunpack.c.h.b16 %v1081
    %v1168 = vunpack.c.l.b16 %v1082
    %v1169 = vunpack.c.h.b16 %v1082
    %v1170 = vunpack.c.l.b16 %v1083
    %v1171 = vunpack.c.h.b16 %v1083
    %v1172 = vunpack.c.l.b16 %v1084
    %v1173 = vunpack.c.h.b16 %v1084
    %v1174 = vunpack.c.l.b16 %v1085
    %v1175 = vunpack.c.h.b16 %v1085
    %v1176 = vunpack.c.l.b16 %v1086
    %v1177 = vunpack.c.h.b16 %v1086
    %v1178 = vunpack.c.l.b16 %v1087
    %v1179 = vunpack.c.h.b16 %v1087
    %v1180 = vunpack.c.l.b16 %v1088
    %v1181 = vunpack.c.h.b16 %v1088
    %v1182 = vunpack.c.l.b16 %v1089
    %v1183 = vunpack.c.h.b16 %v1089
    %v1184 = vunpack.c.l.b16 %v1090
    %v1185 = vunpack.c.h.b16 %v1090
    %v1186 = vunpack.c.l.b16 %v1091
    %v1187 = vunpack.c.h.b16 %v1091
    %v1188 = vunpack.c.l.b16 %v1092
    %v1189 = vunpack.c.h.b16 %v1092
    %v1190 = vunpack.c.l.b16 %v1093
    %v1191 = vunpack.c.h.b16 %v1093
    %v1192 = vunpack.c.l.b16 %v1094
    %v1193 = vunpack.c.h.b16 %v1094
    %v1194 = vunpack.c.l.b16 %v1095
    %v1195 = vunpack.c.h.b16 %v1095
    %v1196 = vunpack.c.l.b16 %v1096
    %v1197 = vunpack.c.h.b16 %v1096
    %v1198 = vunpack.c.l.b16 %v1097
    %v1199 = vunpack.c.h.b16 %v1097
    %v1200 = vpack.c.b16 %v1138, %v1136
    %v1201 = vpack.c.b16 %v1139, %v1137
    %v1202 = vpack.c.b16 %v1142, %v1140
    %v1203 = vpack.c.b16 %v1143, %v1141
    %v1204 = vpack.c.b16 %v1146, %v1144
    %v1205 = vpack.c.b16 %v1147, %v1145
    %v1206 = vpack.c.b16 %v1150, %v1148
    %v1207 = vpack.c.b16 %v1151, %v1149
    %v1208 = vpack.c.b16 %v1154, %v1152
    %v1209 = vpack.c.b16 %v1155, %v1153
    %v1210 = vpack.c.b16 %v1158, %v1156
    %v1211 = vpack.c.b16 %v1159, %v1157
    %v1212 = vpack.c.b16 %v1162, %v1160
    %v1213 = vpack.c.b16 %v1163, %v1161
    %v1214 = vpack.c.b16 %v1166, %v1164
    %v1215 = vpack.c.b16 %v1167, %v1165
    %v1216 = vpack.c.b16 %v1170, %v1168
    %v1217 = vpack.c.b16 %v1171, %v1169
    %v1218 = vpack.c.b16 %v1174, %v1172
    %v1219 = vpack.c.b16 %v1175, %v1173
    %v1220 = vpack.c.b16 %v1178, %v1176
    %v1221 = vpack.c.b16 %v1179, %v1177
    %v1222 = vpack.c.b16 %v1182, %v1180
    %v1223 = vpack.c.b16 %v1183, %v1181
    %v1224 = vpack.c.b16 %v1186, %v1184
    %v1225 = vpack.c.b16 %v1187, %v1185
    %v1226 = vpack.c.b16 %v1190, %v1188
    %v1227 = vpack.c.b16 %v1191, %v1189
    %v1228 = vpack.c.b16 %v1194, %v1192
    %v1229 = vpack.c.b16 %v1195, %v1193
    %v1230 = vpack.c.b16 %v1198, %v1196
    %v1231 = vpack.c.b16 %v1199, %v1197
    %1264 = vmatpush.bf16.msra.mxu0 %v1214
    %1265 = vmatpush.bf16.msra.mxu0 %v1212
    %1266 = vmatpush.bf16.msra.mxu0 %v1210
    %1267 = vmatpush.bf16.msra.mxu0 %v1208
    %1268 = vmatpush.bf16.msra.mxu0 %v1206
    %1269 = vmatpush.bf16.msra.mxu0 %v1204
    %1270 = vmatpush.bf16.msra.mxu0 %v1202
    %1271 = vmatpush.bf16.msra.mxu0 %v1200
    %1272 = vmatmul.bf16.gmra.mxu0 %v1064
    %v1273 = vpop.f32.mrf.mxu0
    %v1274 = vadd.f32 %v1100, %v1273
    %v1275 = vpop.f32.mrf.mxu0
    %1276 = vdwg.mxu0
    %1277 = vmatpush.bf16.msra.mxu0 %v1230
    %1278 = vmatpush.bf16.msra.mxu0 %v1228
    %1279 = vmatpush.bf16.msra.mxu0 %v1226
    %1280 = vmatpush.bf16.msra.mxu0 %v1224
    %1281 = vmatpush.bf16.msra.mxu0 %v1222
    %1282 = vmatpush.bf16.msra.mxu0 %v1220
    %1283 = vmatpush.bf16.msra.mxu0 %v1218
    %1284 = vmatpush.bf16.msra.mxu0 %v1216
    %1285 = vmatmul.bf16.gmra.mxu0 %v1065
    %v1286 = vpop.f32.mrf.mxu0
    %v1287 = vadd.f32 %v1274, %v1286
    %v1288 = vpop.f32.mrf.mxu0
    %1289 = vdwg.mxu0
    %1290 = vmatpush.bf16.msra.mxu0 %v1215
    %1291 = vmatpush.bf16.msra.mxu0 %v1213
    %1292 = vmatpush.bf16.msra.mxu0 %v1211
    %1293 = vmatpush.bf16.msra.mxu0 %v1209
    %1294 = vmatpush.bf16.msra.mxu0 %v1207
    %1295 = vmatpush.bf16.msra.mxu0 %v1205
    %1296 = vmatpush.bf16.msra.mxu0 %v1203
    %1297 = vmatpush.bf16.msra.mxu0 %v1201
    %1298 = vmatmul.bf16.gmra.mxu0 %v1064
    %v1299 = vpop.f32.mrf.mxu0
    %v1300 = vadd.f32 %v1101, %v1299
    %v1301 = vpop.f32.mrf.mxu0
    %1302 = vdwg.mxu0
    %1303 = vmatpush.bf16.msra.mxu0 %v1231
    %1304 = vmatpush.bf16.msra.mxu0 %v1229
    %1305 = vmatpush.bf16.msra.mxu0 %v1227
    %1306 = vmatpush.bf16.msra.mxu0 %v1225
    %1307 = vmatpush.bf16.msra.mxu0 %v1223
    %1308 = vmatpush.bf16.msra.mxu0 %v1221
    %1309 = vmatpush.bf16.msra.mxu0 %v1219
    %1310 = vmatpush.bf16.msra.mxu0 %v1217
    %1311 = vmatmul.bf16.gmra.mxu0 %v1065
    %v1312 = vpop.f32.mrf.mxu0
    %v1313 = vadd.f32 %v1300, %v1312
    %v1314 = vpop.f32.mrf.mxu0
    %1315 = vdwg.mxu0
    %v1316 = vmax.f32 %v1287, 0.0
    %v1317 = vmax.f32 %v1313, 0.0
    %v1318 = vpack.c.bf16 %v1316, %v1316
    %v1319 = vpack.c.bf16 %v1317, %v1317
    %v1320 = vld [vmem:[%s6] sm:$0xf]
    %v1321 = vld [vmem:[%s6 + $0x4] sm:$0xf]
    %v1322 = vld [vmem:[%s6 + $0x8] sm:$0xf]
    %v1323 = vld [vmem:[%s6 + $0xc] sm:$0xf]
    %v1324 = vld [vmem:[%s6 + $0x10] sm:$0xf]
    %v1325 = vld [vmem:[%s6 + $0x14] sm:$0xf]
    %v1326 = vld [vmem:[%s6 + $0x18] sm:$0xf]
    %v1327 = vld [vmem:[%s6 + $0x1c] sm:$0xf]
    %v1328 = vld [vmem:[%s6 + $0x20] sm:$0xf]
    %v1329 = vld [vmem:[%s6 + $0x24] sm:$0xf]
    %v1330 = vld [vmem:[%s6 + $0x28] sm:$0xf]
    %v1331 = vld [vmem:[%s6 + $0x2c] sm:$0xf]
    %v1332 = vld [vmem:[%s6 + $0x30] sm:$0xf]
    %v1333 = vld [vmem:[%s6 + $0x34] sm:$0xf]
    %v1334 = vld [vmem:[%s6 + $0x38] sm:$0xf]
    %v1335 = vld [vmem:[%s6 + $0x3c] sm:$0xf]
    %v1336 = vld [vmem:[%s6 + $0x40] sm:$0xf]
    %v1337 = vld [vmem:[%s6 + $0x44] sm:$0xf]
    %v1338 = vld [vmem:[%s6 + $0x48] sm:$0xf]
    %v1339 = vld [vmem:[%s6 + $0x4c] sm:$0xf]
    %v1340 = vld [vmem:[%s6 + $0x50] sm:$0xf]
    %v1341 = vld [vmem:[%s6 + $0x54] sm:$0xf]
    %v1342 = vld [vmem:[%s6 + $0x58] sm:$0xf]
    %v1343 = vld [vmem:[%s6 + $0x5c] sm:$0xf]
    %v1344 = vld [vmem:[%s6 + $0x60] sm:$0xf]
    %v1345 = vld [vmem:[%s6 + $0x64] sm:$0xf]
    %v1346 = vld [vmem:[%s6 + $0x68] sm:$0xf]
    %v1347 = vld [vmem:[%s6 + $0x6c] sm:$0xf]
    %v1348 = vld [vmem:[%s6 + $0x70] sm:$0xf]
    %v1349 = vld [vmem:[%s6 + $0x74] sm:$0xf]
    %v1350 = vld [vmem:[%s6 + $0x78] sm:$0xf]
    %v1351 = vld [vmem:[%s6 + $0x7c] sm:$0xf]
    %v1352 = vld [vmem:[%s7] sm:$0x1]
    %v1354 = vperm.slane %v1352, 0
    %v1388 = vunpack.c.l.b16 %v1320
    %v1389 = vunpack.c.l.b16 %v1321
    %v1390 = vunpack.c.l.b16 %v1322
    %v1391 = vunpack.c.l.b16 %v1323
    %v1392 = vunpack.c.l.b16 %v1324
    %v1393 = vunpack.c.l.b16 %v1325
    %v1394 = vunpack.c.l.b16 %v1326
    %v1395 = vunpack.c.l.b16 %v1327
    %v1396 = vunpack.c.l.b16 %v1328
    %v1397 = vunpack.c.l.b16 %v1329
    %v1398 = vunpack.c.l.b16 %v1330
    %v1399 = vunpack.c.l.b16 %v1331
    %v1400 = vunpack.c.l.b16 %v1332
    %v1401 = vunpack.c.l.b16 %v1333
    %v1402 = vunpack.c.l.b16 %v1334
    %v1403 = vunpack.c.l.b16 %v1335
    %v1404 = vunpack.c.l.b16 %v1336
    %v1405 = vunpack.c.l.b16 %v1337
    %v1406 = vunpack.c.l.b16 %v1338
    %v1407 = vunpack.c.l.b16 %v1339
    %v1408 = vunpack.c.l.b16 %v1340
    %v1409 = vunpack.c.l.b16 %v1341
    %v1410 = vunpack.c.l.b16 %v1342
    %v1411 = vunpack.c.l.b16 %v1343
    %v1412 = vunpack.c.l.b16 %v1344
    %v1413 = vunpack.c.l.b16 %v1345
    %v1414 = vunpack.c.l.b16 %v1346
    %v1415 = vunpack.c.l.b16 %v1347
    %v1416 = vunpack.c.l.b16 %v1348
    %v1417 = vunpack.c.l.b16 %v1349
    %v1418 = vunpack.c.l.b16 %v1350
    %v1419 = vunpack.c.l.b16 %v1351
    %v1420 = vpack.c.b16 %v1389, %v1388
    %v1421 = vpack.c.b16 %v1391, %v1390
    %v1422 = vpack.c.b16 %v1393, %v1392
    %v1423 = vpack.c.b16 %v1395, %v1394
    %v1424 = vpack.c.b16 %v1397, %v1396
    %v1425 = vpack.c.b16 %v1399, %v1398
    %v1426 = vpack.c.b16 %v1401, %v1400
    %v1427 = vpack.c.b16 %v1403, %v1402
    %v1428 = vpack.c.b16 %v1405, %v1404
    %v1429 = vpack.c.b16 %v1407, %v1406
    %v1430 = vpack.c.b16 %v1409, %v1408
    %v1431 = vpack.c.b16 %v1411, %v1410
    %v1432 = vpack.c.b16 %v1413, %v1412
    %v1433 = vpack.c.b16 %v1415, %v1414
    %v1434 = vpack.c.b16 %v1417, %v1416
    %v1435 = vpack.c.b16 %v1419, %v1418
    %1452 = vmatpush.bf16.msra.mxu0 %v1427
    %1453 = vmatpush.bf16.msra.mxu0 %v1426
    %1454 = vmatpush.bf16.msra.mxu0 %v1425
    %1455 = vmatpush.bf16.msra.mxu0 %v1424
    %1456 = vmatpush.bf16.msra.mxu0 %v1423
    %1457 = vmatpush.bf16.msra.mxu0 %v1422
    %1458 = vmatpush.bf16.msra.mxu0 %v1421
    %1459 = vmatpush.bf16.msra.mxu0 %v1420
    %1460 = vmatmul.bf16.gmra.mxu0 %v1318
    %v1461 = vpop.f32.mrf.mxu0
    %v1462 = vadd.f32 %v1354, %v1461
    %v1463 = vpop.f32.mrf.mxu0
    %1464 = vdwg.mxu0
    %1465 = vmatpush.bf16.msra.mxu0 %v1435
    %1466 = vmatpush.bf16.msra.mxu0 %v1434
    %1467 = vmatpush.bf16.msra.mxu0 %v1433
    %1468 = vmatpush.bf16.msra.mxu0 %v1432
    %1469 = vmatpush.bf16.msra.mxu0 %v1431
    %1470 = vmatpush.bf16.msra.mxu0 %v1430
    %1471 = vmatpush.bf16.msra.mxu0 %v1429
    %1472 = vmatpush.bf16.msra.mxu0 %v1428
    %1473 = vmatmul.bf16.gmra.mxu0 %v1319
    %v1474 = vpop.f32.mrf.mxu0
    %v1475 = vadd.f32 %v1462, %v1474
    %v1476 = vpop.f32.mrf.mxu0
    %1477 = vdwg.mxu0
    %v1478 = vmul.f32 %v1475, %v1475
    %1479 = vadd.xlane.f32.xlu0 %v1478
    %v1480 = vpop.xlane.xlu0 %1479
    %v1481 = vmax.f32 %v1480, 1e-24
    %v1482 = vrsqrt.pop %v1481
    %v1483 = vmul.f32 %v1482, %v1481
    %v1484 = vmul.f32 %v1483, %v1482
    %v1485 = vmul.f32 0.5, %v1484
    %v1486 = vsub.f32 1.5, %v1485
    %v1487 = vmul.f32 %v1482, %v1486
    %vm1488 = vweird.f32 %v1481
    %vm1489 = vweird.f32 %v1482
    %vm1490 = vmor %vm1488, %vm1489
    %v1491 = vsel %vm1490, %v1482, %v1487
    %v1492 = vmul.f32 %v1475, %v1491
    %1493 = vst [vmem:[#allocation9] sm:$0xff] %v1492
    %1494 = vst [vmem:[#allocation2] sm:$0xff] %v1492
    %s1495 = sld [smem:[#allocation5]]
    %s1496 = scalar_lea.vmem %s10, %s1495
    // Predicated region
    $region34: #{contrastive_forward.1} parent=1 // pred_check
      _
    $region35: #{contrastive_forward.1} parent=1 // pred_check_branch
      %1498 = sbr.rel (0) target = $region37
    $region36: #{contrastive_forward.1} parent=1 // pred_region
      // Predicated region
      $region49: #{contrastive_forward.1} parent=36 // pred_check
        _
      $region50: #{contrastive_forward.1} parent=36 // pred_check_branch
        %1514 = sbr.rel (0) target = $region52
      $region51: #{contrastive_forward.1} parent=36 // pred_region
        loop: start=0, step=1, limit=1
        $region53: #{contrastive_forward.1} parent=51 // loop_pre_header
          _
        $region54: #{contrastive_forward.1} parent=51 // loop_header
          %s1516 = sphi 0, %s1520
          %p1517 = scmp.ge.s32.totalorder %s1516, 1
          %s1521 = sphi [#allocation2], [#allocation2]
          %s1522 = sphi %s1496, %s1496
        $region55: #{contrastive_forward.1} parent=51 // loop_header_branch
          %1519 = sbr.rel (%p1517) target = $region59
        $region56: #{contrastive_forward.1} parent=51 // loop_body
          %v1523 = vld [vmem:[%s1521] sm:$0xff]
          %1524 = vst [vmem:[%s1522] sm:$0xff] %v1523
        $region57: #{contrastive_forward.1} parent=51 // loop_footer
          %s1520 = sadd.s32 1, %s1516
        $region58: #{contrastive_forward.1} parent=51 // loop_footer_branch
          %1515 = sbr.rel target = $region54
        $region59: #{contrastive_forward.1} parent=51 // loop_exit
          _
      $region52: #{contrastive_forward.1} parent=36 // pred_fallthru
        _
      // Predicated region
      $region60: #{contrastive_forward.1} parent=36 // pred_check
        _
      $region61: #{contrastive_forward.1} parent=36 // pred_check_branch
        %1526 = sbr.rel target = $region63
      $region62: #{contrastive_forward.1} parent=36 // pred_region
        _
      $region63: #{contrastive_forward.1} parent=36 // pred_fallthru
        _
    $region37: #{contrastive_forward.1} parent=1 // pred_fallthru
      _
    // Predicated region
    $region38: #{contrastive_forward.1} parent=1 // pred_check
      _
    $region39: #{contrastive_forward.1} parent=1 // pred_check_branch
      %1500 = sbr.rel target = $region41
    $region40: #{contrastive_forward.1} parent=1 // pred_region
      %s1502 = ssub.s32 256, 1
      loop: start=0, step=1, limit=1
      $region42: #{contrastive_forward.1} parent=40 // loop_pre_header
        _
      $region43: #{contrastive_forward.1} parent=40 // loop_header
        %s1504 = sphi 0, %s1508
        %p1505 = scmp.ge.s32.totalorder %s1504, 1
        %s1509 = sphi [#allocation2], [#allocation2]
        %s1510 = sphi %s1496, %s1496
      $region44: #{contrastive_forward.1} parent=40 // loop_header_branch
        %1507 = sbr.rel (%p1505) target = $region48
      $region45: #{contrastive_forward.1} parent=40 // loop_body
        %v1511 = vld [vmem:[%s1509] sm:%s1502]
        %1512 = vst [vmem:[%s1510] sm:%s1502] %v1511
      $region46: #{contrastive_forward.1} parent=40 // loop_footer
        %s1508 = sadd.s32 1, %s1504
      $region47: #{contrastive_forward.1} parent=40 // loop_footer_branch
        %1503 = sbr.rel target = $region43
      $region48: #{contrastive_forward.1} parent=40 // loop_exit
        _
    $region41: #{contrastive_forward.1} parent=1 // pred_fallthru
      _
    // Predicated region
    $region64: #{contrastive_forward.1} parent=1 // pred_check
      _
    $region65: #{contrastive_forward.1} parent=1 // pred_check_branch
      %1529 = sbr.rel (0) target = $region67
    $region66: #{contrastive_forward.1} parent=1 // pred_region
      %1530 = vsyncadd [#allocation3], 128
    $region67: #{contrastive_forward.1} parent=1 // pred_fallthru
      _
    %s1531 = smul.u32 8, 1
    %s1532 = sshll.u32 %s1531, 4
    %1533 = dma.done [#allocation3], %s1532
    // Predicated region
    $region68: #{contrastive_forward.1} parent=1 // pred_check
      _
    $region69: #{contrastive_forward.1} parent=1 // pred_check_branch
      %1535 = sbr.rel (0) target = $region71
    $region70: #{contrastive_forward.1} parent=1 // pred_region
      %1537 = vsyncadd [#allocation8], 0
      %s1539 = sshll.u32 [#allocation9], 4
      %s1540 = int_to_ptr.vmem [resolvable:$true] %s1539
      %s1541 = sshll.u32 %s9, 4
      %s1542 = int_to_ptr.hbm [resolvable:$true] %s1541
      %1544 = dma.vmem_to_hbm [thread:$0]  %s1540, 128, %s1542, [#allocation8]
    $region71: #{contrastive_forward.1} parent=1 // pred_fallthru
      _
    // Predicated region
    $region72: #{contrastive_forward.1} parent=1 // pred_check
      _
    $region73: #{contrastive_forward.1} parent=1 // pred_check_branch
      %1546 = sbr.rel (0) target = $region75
    $region74: #{contrastive_forward.1} parent=1 // pred_region
      %1548 = dma.done [#allocation8], 128
    $region75: #{contrastive_forward.1} parent=1 // pred_fallthru
      _
    %1549 = vsyncpa [#allocation7], 1
    %1550 = vsyncpa [#allocation8], 1
  %1551 = vsyncmov [#allocation3]
  %s1552 = vpop.sfrf %1551
  %p1553 = scmp.eq.s32.totalorder %s1552, 0
  %p1554 = pneg %p1553
  %1556 = shalt.err (%p1554)

</llo_original>
